<compile_context>
chip_gen: v7x
topology: tpu7x:2x2x1
jax: 0.10.0
libtpu: 0.0.40
codegen_flags: <defaults>
</compile_context>

<pallas_src>
import jax
import jax.numpy as jnp
from jax.experimental import pallas as pl
from jax.experimental.pallas import tpu as pltpu


def _round_up(v, m):
    return ((v + m - 1) // m) * m


def _vmem_capacity_bytes():
    try:
        return int(pltpu.get_tpu_info().vmem_capacity_bytes)
    except Exception:
        return 64 * 1024 * 1024  # conservative fallback (safe on every generation)


def _pick_tile_n(n, target):
    """Return (tile, padded_n): tile is a multiple of 8 and <= target; padded_n is the
    row-padded N that tile divides (prefers an exact divisor of n to avoid padding)."""
    t = min(max(target, 8), max(n, 8))
    t = max(8, (t // 8) * 8)
    cand = t
    while cand >= max(8, t // 2):
        if n % cand == 0:
            return cand, n
        cand -= 8
    return t, _round_up(n, t)


def _pam_kernel(x_ref, xp_ref, kT_ref, wqg_ref, bqg_ref, o_ref):
    # x_ref : (1, tN, Cpad)  bf16  query-side pixel tile (streams over the N axis)
    # xp_ref: (1, M,  Cpad)  bf16  pooled key/value pixels (resident across N tiles)
    # kT_ref: (1, Kg, M)     bf16  precomputed, transposed key projection (resident)
    x = x_ref[0]
    xp = xp_ref[0]
    kT = kT_ref[0]

    # Fused query + gamma projection (gamma conv lives in column 0 of wqg); f32 accum.
    qg = jnp.dot(x, wqg_ref[...], preferred_element_type=jnp.float32) + bqg_ref[0]  # (tN, Kg) f32

    # energy[n, m] = <q_n, k_m>; the gamma / zero-padded columns of qg hit zero rows
    # of kT, so they contribute nothing.  bf16 operands, f32 accumulation.
    energy = jnp.dot(qg.astype(kT.dtype), kT, preferred_element_type=jnp.float32)   # (tN, M)

    # softmax over the key axis (dim=-1 in the PyTorch code), f32, late normalization.
    e_max = jnp.max(energy, axis=-1, keepdims=True)
    e = jnp.exp(energy - e_max)                                                      # (tN, M)
    s = jnp.sum(e, axis=-1, keepdims=True)                                           # (tN, 1)
    r = pl.reciprocal(s, approx=True)       # EUP vrcp — free slot alongside the exps
    r = r * (2.0 - s * r)                   # one Newton step -> ~f32 accuracy

    # out[n, c] = (sum_m e[n, m] * xp[m, c]) / s[n]   (normalize AFTER the PV matmul)
    out = jnp.dot(e.astype(xp.dtype), xp, preferred_element_type=jnp.float32) * r   # (tN, Cpad)

    # gamma gate from the fused projection, then blend: (1 - g)*out + g*x = out + g*(x - out)
    g = jax.nn.sigmoid(qg[:, 0:1])                                                   # (tN, 1)
    o_ref[0] = (out + g * (x.astype(jnp.float32) - out)).astype(o_ref.dtype)


def pam_module(x_nchw, wq, bq, wk, bk, wg, bg, *, tile_n=None):
    """x_nchw: (B, C, H, W). Weights: wq/wk (C, K), wg (C, 1); biases (K,), (K,), (1,)."""
    B, C, H, W = x_nchw.shape
    K = wq.shape[1]
    Hp, Wp = H // 2, W // 2
    N, M = H * W, Hp * Wp

    Cpad = _round_up(C, 128)       # lane-dense channels for x / xp / out
    Kg = _round_up(K + 1, 128)     # fused query(K) + gamma(1) columns; stays 128 for K < 128

    vmem_cap = _vmem_capacity_bytes()
    small_vmem = vmem_cap <= 64 * 1024 * 1024            # v7x-class parts
    if tile_n is None:
        tile_n = 256 if small_vmem else 1024
    vmem_limit = min(vmem_cap * 3 // 4, 112 * 1024 * 1024)

    tN, Npad = _pick_tile_n(N, tile_n)

    cdt = jnp.bfloat16  # MXU operand dtype (f32 accumulation inside the kernel)

    # ---- plain-JAX glue: 2x2 max-pool + channels-last flatten + bf16 cast + pad ----
    x_nhwc = jnp.transpose(x_nchw, (0, 2, 3, 1))                          # (B, H, W, C)
    xp_nhwc = jnp.max(x_nhwc.reshape(B, Hp, 2, Wp, 2, C), axis=(2, 4))    # (B, Hp, Wp, C)

    x_flat = jnp.pad(x_nhwc.reshape(B, N, C).astype(cdt),
                     ((0, 0), (0, Npad - N), (0, Cpad - C)))              # (B, Npad, Cpad)
    xp_flat = jnp.pad(xp_nhwc.reshape(B, M, C).astype(cdt),
                      ((0, 0), (0, 0), (0, Cpad - C)))                    # (B, M, Cpad)

    # Fused, padded query/gamma weights: column 0 = gamma conv, columns 1..K = query conv.
    wqg = (jnp.zeros((Cpad, Kg), cdt)
           .at[:C, 0].set(wg[:, 0].astype(cdt))
           .at[:C, 1:K + 1].set(wq.astype(cdt)))
    bqg = (jnp.zeros((1, Kg), jnp.float32)
           .at[0, 0].set(bg[0].astype(jnp.float32))
           .at[0, 1:K + 1].set(bq.astype(jnp.float32)))

    # Key projection precomputed once per batch with a plain XLA matmul, stored transposed
    # as (B, Kg, M) bf16.  Row 0 (the gamma column's partner) stays zero so the fused
    # gamma column of qg contributes nothing to the energy contraction.
    k_bmk = (jnp.einsum("bmc,ck->bmk",
                        xp_nhwc.reshape(B, M, C).astype(jnp.float32),
                        wk.astype(jnp.float32))
             + bk.astype(jnp.float32)[None, None, :])                     # (B, M, K) f32
    kT = jnp.zeros((B, Kg, M), cdt).at[:, 1:K + 1, :].set(
        jnp.transpose(k_bmk, (0, 2, 1)).astype(cdt))                      # (B, Kg, M)

    out_flat = pl.pallas_call(
        _pam_kernel,
        out_shape=jax.ShapeDtypeStruct((B, Npad, Cpad), x_nchw.dtype),
        grid_spec=pltpu.PrefetchScalarGridSpec(
            num_scalar_prefetch=0,
            grid=(B, Npad // tN),
            in_specs=[
                pl.BlockSpec((1, tN, Cpad), lambda b, n: (b, n, 0)),   # x tile (streams over N)
                pl.BlockSpec((1, M, Cpad), lambda b, n: (b, 0, 0)),    # xp (resident over N)
                pl.BlockSpec((1, Kg, M), lambda b, n: (b, 0, 0)),      # kT (resident over N)
                pl.BlockSpec((Cpad, Kg), lambda b, n: (0, 0)),         # Wq | Wgamma fused
                pl.BlockSpec((1, Kg), lambda b, n: (0, 0)),            # bq | bgamma fused
            ],
            out_specs=pl.BlockSpec((1, tN, Cpad), lambda b, n: (b, n, 0)),
        ),
        compiler_params=pltpu.CompilerParams(
            # No carried state across N tiles anymore -> both axes parallel (v7x: 2 TCs).
            dimension_semantics=("parallel", "parallel"),
            vmem_limit_bytes=int(vmem_limit),
        ),
    )(x_flat, xp_flat, kT, wqg, bqg)

    # strip row/channel padding, back to NCHW
    out = out_flat[:, :N, :C].reshape(B, H, W, C)
    return jnp.transpose(out, (0, 3, 1, 2))


def _reference(x_nchw, wq, bq, wk, bk, wg, bg):
    """Pure-JAX f32 reference mirroring the PyTorch forward, for verification."""
    B, C, H, W = x_nchw.shape
    Hp, Wp = H // 2, W // 2
    xp = jnp.max(x_nchw.reshape(B, C, Hp, 2, Wp, 2), axis=(3, 5))
    x_f = x_nchw.reshape(B, C, H * W)            # (B, C, N)
    xp_f = xp.reshape(B, C, Hp * Wp)             # (B, C, M)
    q = jnp.einsum("ck,bcn->bnk", wq, x_f) + bq[None, None, :]      # (B, N, K)
    k = jnp.einsum("ck,bcm->bkm", wk, xp_f) + bk[None, :, None]     # (B, K, M)
    energy = jnp.einsum("bnk,bkm->bnm", q, k)
    att = jax.nn.softmax(energy, axis=-1)
    out = jnp.einsum("bcm,bnm->bcn", xp_f, att).reshape(B, C, H, W)
    gamma = jax.nn.sigmoid(
        jnp.einsum("co,bcn->bon", wg, x_f) + bg[None, :, None]).reshape(B, 1, H, W)
    return (1.0 - gamma) * out + gamma * x_nchw


if __name__ == "__main__":
    # Small shapes consistent with the module: in_dim=C, key_dim=K, 1x1 convs, 2x2 pool.
    B, C, H, W = 2, 4, 16, 16
    K = 4  # key_dim

    key = jax.random.PRNGKey(0)
    kx, kwq, kbq, kwk, kbk, kwg, kbg = jax.random.split(key, 7)

    x = jax.random.normal(kx, (B, C, H, W), dtype=jnp.float32)

    # PyTorch conv weight (out, in, 1, 1) stored here as (in, out).
    wq = jax.random.normal(kwq, (C, K), dtype=jnp.float32) * 0.1
    bq = jax.random.normal(kbq, (K,), dtype=jnp.float32) * 0.1
    wk = jax.random.normal(kwk, (C, K), dtype=jnp.float32) * 0.1
    bk = jax.random.normal(kbk, (K,), dtype=jnp.float32) * 0.1
    wg = jax.random.normal(kwg, (C, 1), dtype=jnp.float32) * 0.1
    bg = jax.random.normal(kbg, (1,), dtype=jnp.float32) * 0.1

    # tile_n=64 so the toy 16x16 image (N=256) exercises the tiled-N / resident-kT path.
    out = jax.block_until_ready(pam_module(x, wq, bq, wk, bk, wg, bg, tile_n=64))
    ref = jax.block_until_ready(_reference(x, wq, bq, wk, bk, wg, bg))

    assert out.shape == (B, C, H, W)
    # bf16 MXU operands (f32 accumulation) vs. a pure-f32 reference -> loosened tolerance.
    assert jnp.max(jnp.abs(out - ref)) < 5e-2, "mismatch vs pure-JAX reference"

    print("KERNEL_OK")
</pallas_src>

<mosaic_0001>
module attributes {stable_mosaic.version = 11 : i64} {
  func.func @_pam_kernel(%arg0: i32, %arg1: i32, %arg2: memref<1x64x128xbf16, #tpu.memory_space<vmem>>, %arg3: memref<1x64x128xbf16, #tpu.memory_space<vmem>>, %arg4: memref<1x128x64xbf16, #tpu.memory_space<vmem>>, %arg5: memref<128x128xbf16, #tpu.memory_space<vmem>>, %arg6: memref<1x128xf32, #tpu.memory_space<vmem>>, %arg7: memref<1x64x128xf32, #tpu.memory_space<vmem>>) attributes {dimension_semantics = [#tpu.dimension_semantics<parallel>, #tpu.dimension_semantics<parallel>], iteration_bounds = array<i64: 2, 4>, scalar_prefetch = 0 : i64, scratch_operands = 0 : i64, tpu.core_type = #tpu.core_type<tc>, window_params = [{transform_indices = @transform_0, window_bounds = array<i64: 1, 64, 128>}, {transform_indices = @transform_1, window_bounds = array<i64: 1, 64, 128>}, {transform_indices = @transform_2, window_bounds = array<i64: 1, 128, 64>}, {pipeline_mode = #tpu.pipeline_mode<synchronous>, transform_indices = @transform_3, window_bounds = array<i64: 128, 128>}, {pipeline_mode = #tpu.pipeline_mode<synchronous>, transform_indices = @transform_4, window_bounds = array<i64: 1, 128>}, {transform_indices = @transform_5, window_bounds = array<i64: 1, 64, 128>}]} {
    %c0 = arith.constant 0 : index
    %c0_0 = arith.constant 0 : index
    %c0_1 = arith.constant 0 : index
    %0 = vector.load %arg2[%c0, %c0_0, %c0_1] : memref<1x64x128xbf16, #tpu.memory_space<vmem>>, vector<1x64x128xbf16>
    %1 = vector.shape_cast %0 : vector<1x64x128xbf16> to vector<64x128xbf16>
    %c0_2 = arith.constant 0 : index
    %c0_3 = arith.constant 0 : index
    %c0_4 = arith.constant 0 : index
    %2 = vector.load %arg3[%c0_2, %c0_3, %c0_4] : memref<1x64x128xbf16, #tpu.memory_space<vmem>>, vector<1x64x128xbf16>
    %3 = vector.shape_cast %2 : vector<1x64x128xbf16> to vector<64x128xbf16>
    %c0_5 = arith.constant 0 : index
    %c0_6 = arith.constant 0 : index
    %c0_7 = arith.constant 0 : index
    %4 = vector.load %arg4[%c0_5, %c0_6, %c0_7] : memref<1x128x64xbf16, #tpu.memory_space<vmem>>, vector<1x128x64xbf16>
    %5 = vector.shape_cast %4 : vector<1x128x64xbf16> to vector<128x64xbf16>
    %c0_8 = arith.constant 0 : index
    %c0_9 = arith.constant 0 : index
    %6 = vector.load %arg5[%c0_8, %c0_9] : memref<128x128xbf16, #tpu.memory_space<vmem>>, vector<128x128xbf16>
    %cst = arith.constant dense<0.000000e+00> : vector<64x128xf32>
    %7 = tpu.matmul %1, %6, %cst {dimension_numbers = #tpu.dot_dimension_numbers<[1], [0], [0], [1], [0, 0, 1, 1], [], []>} : vector<64x128xbf16>, vector<128x128xbf16>, vector<64x128xf32> -> vector<64x128xf32>
    %c0_10 = arith.constant 0 : index
    %c0_11 = arith.constant 0 : index
    %8 = vector.load %arg6[%c0_10, %c0_11] : memref<1x128xf32, #tpu.memory_space<vmem>>, vector<1x128xf32>
    %9 = vector.shape_cast %8 : vector<1x128xf32> to vector<128xf32>
    %10 = vector.shape_cast %9 : vector<128xf32> to vector<1x128xf32>
    %11 = vector.broadcast %10 : vector<1x128xf32> to vector<64x128xf32>
    %12 = arith.addf %7, %11 : vector<64x128xf32>
    %13 = arith.truncf %12 : vector<64x128xf32> to vector<64x128xbf16>
    %cst_12 = arith.constant dense<0.000000e+00> : vector<64x64xf32>
    %14 = tpu.matmul %13, %5, %cst_12 {dimension_numbers = #tpu.dot_dimension_numbers<[1], [0], [0], [1], [0, 0, 1, 1], [], []>} : vector<64x128xbf16>, vector<128x64xbf16>, vector<64x64xf32> -> vector<64x64xf32>
    %cst_13 = arith.constant dense<0xFF800000> : vector<64xf32>
    %15 = vector.multi_reduction <maximumf>, %14, %cst_13 [1] : vector<64x64xf32> to vector<64xf32>
    %16 = vector.shape_cast %15 : vector<64xf32> to vector<64x1xf32>
    %17 = vector.broadcast %16 : vector<64x1xf32> to vector<64x64xf32>
    %18 = arith.subf %14, %17 : vector<64x64xf32>
    %19 = math.exp %18 : vector<64x64xf32>
    %cst_14 = arith.constant dense<0.000000e+00> : vector<64xf32>
    %20 = vector.multi_reduction <add>, %19, %cst_14 [1] : vector<64x64xf32> to vector<64xf32>
    %21 = vector.shape_cast %20 : vector<64xf32> to vector<64x1xf32>
    %22 = tpu.reciprocal %21 {approx = true} : vector<64x1xf32> -> vector<64x1xf32>
    %23 = arith.mulf %21, %22 : vector<64x1xf32>
    %cst_15 = arith.constant 2.000000e+00 : f32
    %24 = vector.broadcast %cst_15 : f32 to vector<64x1xf32>
    %25 = arith.subf %24, %23 : vector<64x1xf32>
    %26 = arith.mulf %22, %25 : vector<64x1xf32>
    %27 = arith.truncf %19 : vector<64x64xf32> to vector<64x64xbf16>
    %cst_16 = arith.constant dense<0.000000e+00> : vector<64x128xf32>
    %28 = tpu.matmul %27, %3, %cst_16 {dimension_numbers = #tpu.dot_dimension_numbers<[1], [0], [0], [1], [0, 0, 1, 1], [], []>} : vector<64x64xbf16>, vector<64x128xbf16>, vector<64x128xf32> -> vector<64x128xf32>
    %29 = vector.broadcast %26 : vector<64x1xf32> to vector<64x128xf32>
    %30 = arith.mulf %28, %29 : vector<64x128xf32>
    %31 = vector.extract_strided_slice %12 {offsets = [0, 0], sizes = [64, 1], strides = [1, 1]} : vector<64x128xf32> to vector<64x1xf32>
    %32 = arith.negf %31 : vector<64x1xf32>
    %33 = math.exp %32 : vector<64x1xf32>
    %cst_17 = arith.constant 1.000000e+00 : f32
    %34 = vector.broadcast %cst_17 : f32 to vector<64x1xf32>
    %35 = arith.addf %34, %33 : vector<64x1xf32>
    %36 = arith.divf %34, %35 : vector<64x1xf32>
    %37 = arith.extf %1 : vector<64x128xbf16> to vector<64x128xf32>
    %38 = arith.subf %37, %30 : vector<64x128xf32>
    %39 = vector.broadcast %36 : vector<64x1xf32> to vector<64x128xf32>
    %40 = arith.mulf %39, %38 : vector<64x128xf32>
    %41 = arith.addf %30, %40 : vector<64x128xf32>
    %c0_18 = arith.constant 0 : index
    %c0_19 = arith.constant 0 : index
    %c0_20 = arith.constant 0 : index
    %42 = vector.load %arg7[%c0_18, %c0_19, %c0_20] : memref<1x64x128xf32, #tpu.memory_space<vmem>>, vector<1x64x128xf32>
    %43 = vector.shape_cast %42 : vector<1x64x128xf32> to vector<64x128xf32>
    %44 = vector.shape_cast %41 : vector<64x128xf32> to vector<1x64x128xf32>
    tpu.vector_store %arg7[%c0_18, %c0_19, %c0_20], %44 {strides = array<i32>} : memref<1x64x128xf32, #tpu.memory_space<vmem>>, vector<1x64x128xf32>,
    return
  }
  func.func @transform_0(%arg0: i32, %arg1: i32) -> (i32, i32, i32) {
    %c0_i32 = arith.constant 0 : i32
    %c0_i32_0 = arith.constant 0 : i32
    return %arg0, %arg1, %c0_i32 : i32, i32, i32
  }
  func.func @transform_1(%arg0: i32, %arg1: i32) -> (i32, i32, i32) {
    %c0_i32 = arith.constant 0 : i32
    %c0_i32_0 = arith.constant 0 : i32
    %c0_i32_1 = arith.constant 0 : i32
    return %arg0, %c0_i32, %c0_i32_0 : i32, i32, i32
  }
  func.func @transform_2(%arg0: i32, %arg1: i32) -> (i32, i32, i32) {
    %c0_i32 = arith.constant 0 : i32
    %c0_i32_0 = arith.constant 0 : i32
    %c0_i32_1 = arith.constant 0 : i32
    return %arg0, %c0_i32, %c0_i32_0 : i32, i32, i32
  }
  func.func @transform_3(%arg0: i32, %arg1: i32) -> (i32, i32) {
    %c0_i32 = arith.constant 0 : i32
    %c0_i32_0 = arith.constant 0 : i32
    %c0_i32_1 = arith.constant 0 : i32
    return %c0_i32, %c0_i32_0 : i32, i32
  }
  func.func @transform_4(%arg0: i32, %arg1: i32) -> (i32, i32) {
    %c0_i32 = arith.constant 0 : i32
    %c0_i32_0 = arith.constant 0 : i32
    %c0_i32_1 = arith.constant 0 : i32
    return %c0_i32, %c0_i32_0 : i32, i32
  }
  func.func @transform_5(%arg0: i32, %arg1: i32) -> (i32, i32, i32) {
    %c0_i32 = arith.constant 0 : i32
    %c0_i32_0 = arith.constant 0 : i32
    return %arg0, %arg1, %c0_i32 : i32, i32, i32
  }
}

</mosaic_0001>

<llo_original>
// kernel: tpu_custom_call.1
$region0: #{tpu_custom_call.1}
  #allocation0 [shape = 'u32[]', space=smem, size = 0x4, offset = 0x4, fixed_abs, tag = 'smem constant byte address 0x4 - core index']
  #allocation1 [shape = 'u32[144,128]{1,0:T(1,128)}', space=vmem, size = 0x12000, scoped, tag = 'internal scratch']
  %s0 = inlined_call_operand.hbm [shape: bf16[2,256,128], index: 0, kind: input, shape index: {}]
  %s1 = inlined_call_operand.vmem [shape: bf16[2,64,128], index: 1, kind: input, shape index: {}]
  %s2 = inlined_call_operand.vmem [shape: bf16[2,128,64], index: 2, kind: input, shape index: {}]
  %s3 = inlined_call_operand.vmem [shape: bf16[128,128], index: 3, kind: input, shape index: {}]
  %s4 = inlined_call_operand.vmem [shape: f32[1,128], index: 4, kind: input, shape index: {}]
  %s5 = inlined_call_operand.hbm [shape: f32[2,256,128], index: 5, kind: output, shape index: {}]
  %s6 = sld [smem:[#allocation0]]
  $region57: #{tpu_custom_call.1} parent=0
    _
  %s8 = ssub.s32 1, %s6
  %s9 = scalar_select 0, %s8, %s6
  $region1: #{tpu_custom_call.1} parent=0
    #allocation2 [shape = 'u8[32768]{0}', space=vmem, size = 0x8000, scoped, tag = 'input window, operand 0']
    #allocation3 [shape = 's32[2]{0}', space=sflag, size = 0x8, scoped, tag = 'scoped memory for tpu_custom_call.1']
    #allocation4 [shape = 's32[2]{0}', space=sflag, size = 0x8, scoped, tag = 'scoped memory for tpu_custom_call.1']
    #allocation5 [shape = 'u8[65536]{0}', space=vmem, size = 0x10000, scoped, tag = 'output window, operand 0']
    %10 = vsyncpa [#allocation3], 0
    %s11 = scalar_lea.sflag [#allocation3], 1
    %12 = vsyncpa %s11, 0
    %13 = vsyncpa [#allocation4], 0
    %s14 = scalar_lea.sflag [#allocation4], 1
    %15 = vsyncpa %s14, 0
    loop: start=0, step=1, limit=10
    $region2: #{tpu_custom_call.1} parent=1 // loop_pre_header
      _
    $region3: #{tpu_custom_call.1} parent=1 // loop_header
      %s17 = sphi 0, %s21
      %p18 = scmp.ge.s32.totalorder %s17, 10
      %s24 = sphi 0, %s36
      %s25 = sphi 0, %s32
      %s26 = sphi 0, %s24
      %s27 = sphi 0, %s25
      %s28 = sphi 0, %s26
      %s29 = sphi 0, %s27
      %s41 = sphi 0, %s43
      %s44 = sphi 0, %s41
      %s45 = sphi 0, %s44
      %s61 = sphi 0, %s45
      %s67 = sphi 0, %s69
      %s70 = sphi 0, %s67
      %s71 = sphi 0, %s70
      %s87 = sphi 0, %s71
      %s93 = sphi 0, %s95
      %s96 = sphi 0, %s93
      %s97 = sphi 0, %s96
      %s113 = sphi 0, %s97
      %s117 = sphi 0, %s117
      %s119 = sphi 0, %s117
      %s120 = sphi 0, %s119
      %s134 = sphi 0, %s120
      %s138 = sphi 0, %s138
      %s140 = sphi 0, %s138
      %s141 = sphi 0, %s140
      %s155 = sphi 0, %s141
      %s163 = sphi 0, %s165
      %s166 = sphi 0, %s163
      %s167 = sphi 0, %s166
      %s183 = sphi 0, %s167
    $region4: #{tpu_custom_call.1} parent=1 // loop_header_branch
      %20 = sbr.rel (%p18) target = $region8
    $region5: #{tpu_custom_call.1} parent=1 // loop_body
      %s22 = ssub.s32 %s17, 1
      %s23 = ssub.s32 %s17, 2
      %s30 = sadd.s32 1, %s25
      %p31 = scmp.ge.s32.totalorder %s30, 4
      %s32 = scalar_select %p31, 0, %s30
      %s33 = sadd.s32 1, %s24
      %s34 = scalar_select %p31, %s33, %s24
      %p35 = scmp.ge.s32.totalorder %s34, 2
      %s36 = scalar_select %p35, 0, %s34
      %s37 = ssub.s32 %s24, %s36
      %s38 = ssub.s32 %s25, %s32
      %s39 = sor.u32 %s37, %s38
      %p40 = scmp.eq.s32.totalorder %s39, 0
      %s42 = sadd.s32 %s41, 1
      %s43 = scalar_select %p40, %s41, %s42
      %p46 = pneg %p40
      %p47 = scmp.eq.s32.totalorder %s17, 7
      %p48 = por %p46, %p47
      %p49 = scmp.ne.s32.totalorder %s41, %s44
      %p50 = scmp.eq.s32.totalorder %s17, 0
      %p51 = por %p49, %p50
      %p52 = scmp.ne.s32.totalorder %s41, %s44
      %p53 = scmp.eq.s32.totalorder %s22, 7
      %p54 = por %p52, %p53
      %p55 = scmp.ne.s32.totalorder %s44, %s45
      %p56 = scmp.eq.s32.totalorder %s22, 0
      %p57 = por %p55, %p56
      %p58 = scmp.ne.s32.totalorder %s44, %s45
      %p59 = scmp.eq.s32.totalorder %s23, 7
      %p60 = por %p58, %p59
      %p62 = scmp.ne.s32.totalorder %s45, %s61
      %p63 = scmp.eq.s32.totalorder %s23, 0
      %p64 = por %p62, %p63
      %s65 = ssub.s32 %s24, %s36
      %p66 = scmp.eq.s32.totalorder %s65, 0
      %s68 = sadd.s32 %s67, 1
      %s69 = scalar_select %p66, %s67, %s68
      %p72 = pneg %p66
      %p73 = scmp.eq.s32.totalorder %s17, 7
      %p74 = por %p72, %p73
      %p75 = scmp.ne.s32.totalorder %s67, %s70
      %p76 = scmp.eq.s32.totalorder %s17, 0
      %p77 = por %p75, %p76
      %p78 = scmp.ne.s32.totalorder %s67, %s70
      %p79 = scmp.eq.s32.totalorder %s22, 7
      %p80 = por %p78, %p79
      %p81 = scmp.ne.s32.totalorder %s70, %s71
      %p82 = scmp.eq.s32.totalorder %s22, 0
      %p83 = por %p81, %p82
      %p84 = scmp.ne.s32.totalorder %s70, %s71
      %p85 = scmp.eq.s32.totalorder %s23, 7
      %p86 = por %p84, %p85
      %p88 = scmp.ne.s32.totalorder %s71, %s87
      %p89 = scmp.eq.s32.totalorder %s23, 0
      %p90 = por %p88, %p89
      %s91 = ssub.s32 %s24, %s36
      %p92 = scmp.eq.s32.totalorder %s91, 0
      %s94 = sadd.s32 %s93, 1
      %s95 = scalar_select %p92, %s93, %s94
      %p98 = pneg %p92
      %p99 = scmp.eq.s32.totalorder %s17, 7
      %p100 = por %p98, %p99
      %p101 = scmp.ne.s32.totalorder %s93, %s96
      %p102 = scmp.eq.s32.totalorder %s17, 0
      %p103 = por %p101, %p102
      %p104 = scmp.ne.s32.totalorder %s93, %s96
      %p105 = scmp.eq.s32.totalorder %s22, 7
      %p106 = por %p104, %p105
      %p107 = scmp.ne.s32.totalorder %s96, %s97
      %p108 = scmp.eq.s32.totalorder %s22, 0
      %p109 = por %p107, %p108
      %p110 = scmp.ne.s32.totalorder %s96, %s97
      %p111 = scmp.eq.s32.totalorder %s23, 7
      %p112 = por %p110, %p111
      %p114 = scmp.ne.s32.totalorder %s97, %s113
      %p115 = scmp.eq.s32.totalorder %s23, 0
      %p116 = por %p114, %p115
      %s118 = sadd.s32 %s117, 1
      %p121 = scmp.eq.s32.totalorder %s17, 7
      %p122 = scmp.ne.s32.totalorder %s117, %s119
      %p123 = scmp.eq.s32.totalorder %s17, 0
      %p124 = por %p122, %p123
      %p125 = scmp.ne.s32.totalorder %s117, %s119
      %p126 = scmp.eq.s32.totalorder %s22, 7
      %p127 = por %p125, %p126
      %p128 = scmp.ne.s32.totalorder %s119, %s120
      %p129 = scmp.eq.s32.totalorder %s22, 0
      %p130 = por %p128, %p129
      %p131 = scmp.ne.s32.totalorder %s119, %s120
      %p132 = scmp.eq.s32.totalorder %s23, 7
      %p133 = por %p131, %p132
      %p135 = scmp.ne.s32.totalorder %s120, %s134
      %p136 = scmp.eq.s32.totalorder %s23, 0
      %p137 = por %p135, %p136
      %s139 = sadd.s32 %s138, 1
      %p142 = scmp.eq.s32.totalorder %s17, 7
      %p143 = scmp.ne.s32.totalorder %s138, %s140
      %p144 = scmp.eq.s32.totalorder %s17, 0
      %p145 = por %p143, %p144
      %p146 = scmp.ne.s32.totalorder %s138, %s140
      %p147 = scmp.eq.s32.totalorder %s22, 7
      %p148 = por %p146, %p147
      %p149 = scmp.ne.s32.totalorder %s140, %s141
      %p150 = scmp.eq.s32.totalorder %s22, 0
      %p151 = por %p149, %p150
      %p152 = scmp.ne.s32.totalorder %s140, %s141
      %p153 = scmp.eq.s32.totalorder %s23, 7
      %p154 = por %p152, %p153
      %p156 = scmp.ne.s32.totalorder %s141, %s155
      %p157 = scmp.eq.s32.totalorder %s23, 0
      %p158 = por %p156, %p157
      %s159 = ssub.s32 %s24, %s36
      %s160 = ssub.s32 %s25, %s32
      %s161 = sor.u32 %s159, %s160
      %p162 = scmp.eq.s32.totalorder %s161, 0
      %s164 = sadd.s32 %s163, 1
      %s165 = scalar_select %p162, %s163, %s164
      %p168 = pneg %p162
      %p169 = scmp.eq.s32.totalorder %s17, 7
      %p170 = por %p168, %p169
      %p171 = scmp.ne.s32.totalorder %s163, %s166
      %p172 = scmp.eq.s32.totalorder %s17, 0
      %p173 = por %p171, %p172
      %p174 = scmp.ne.s32.totalorder %s163, %s166
      %p175 = scmp.eq.s32.totalorder %s22, 7
      %p176 = por %p174, %p175
      %p177 = scmp.ne.s32.totalorder %s166, %s167
      %p178 = scmp.eq.s32.totalorder %s22, 0
      %p179 = por %p177, %p178
      %p180 = scmp.ne.s32.totalorder %s166, %s167
      %p181 = scmp.eq.s32.totalorder %s23, 7
      %p182 = por %p180, %p181
      %p184 = scmp.ne.s32.totalorder %s167, %s183
      %p185 = scmp.eq.s32.totalorder %s23, 0
      %p186 = por %p184, %p185
      %p187 = scmp.le.s32.totalorder 1, %s17
      %p188 = scmp.lt.s32.totalorder %s17, 9
      %p189 = pnand %p187, %p188
      %p190 = pneg %p189
      // Predicated region
      $region9: #{tpu_custom_call.1} parent=5 // pred_check
        _
      $region10: #{tpu_custom_call.1} parent=5 // pred_check_branch
        %192 = sbr.rel (%p189) target = $region12
      $region11: #{tpu_custom_call.1} parent=5 // pred_region
        %s193 = ssub.s32 %s17, 1
        // Predicated region
        $region13: #{tpu_custom_call.1} parent=11 // pred_check
          %p194 = pneg %p130
        $region14: #{tpu_custom_call.1} parent=11 // pred_check_branch
          %196 = sbr.rel (%p194) target = $region16
        $region15: #{tpu_custom_call.1} parent=11 // pred_region
          _
        $region16: #{tpu_custom_call.1} parent=11 // pred_fallthru
          _
        // Predicated region
        $region17: #{tpu_custom_call.1} parent=11 // pred_check
          %p197 = pneg %p151
        $region18: #{tpu_custom_call.1} parent=11 // pred_check_branch
          %199 = sbr.rel (%p197) target = $region20
        $region19: #{tpu_custom_call.1} parent=11 // pred_region
          _
        $region20: #{tpu_custom_call.1} parent=11 // pred_fallthru
          _
      $region12: #{tpu_custom_call.1} parent=5 // pred_fallthru
        _
      %p200 = scmp.lt.s32.totalorder %s17, 8
      // Predicated region
      $region21: #{tpu_custom_call.1} parent=5 // pred_check
        %p201 = pneg %p200
      $region22: #{tpu_custom_call.1} parent=5 // pred_check_branch
        %203 = sbr.rel (%p201) target = $region24
      $region23: #{tpu_custom_call.1} parent=5 // pred_region
        // Predicated region
        $region25: #{tpu_custom_call.1} parent=23 // pred_check
          %p204 = pneg %p51
        $region26: #{tpu_custom_call.1} parent=23 // pred_check_branch
          %206 = sbr.rel (%p204) target = $region28
        $region27: #{tpu_custom_call.1} parent=23 // pred_region
          %s207 = sand.u32 %s41, 1
          %s208 = scalar_lea.sflag [#allocation3], %s207
          %s209 = sand.u32 %s41, 1
          %s210 = smul.addr %s209, 32
          %s211 = scalar_lea.vmem [#allocation2], %s210
          %s212 = smul.u32 8, %s25
          %s214 = ssub.s32 512, 512
          %215 = vsyncadd %s208, %s214
          %s216 = smul.addr %s24, 32
          %s217 = sadd.s32 %s212, %s216
          %s218 = smul.addr %s217, 64
          %s219 = scalar_lea.hbm %s0, %s218
          %s220 = sshll.u32 %s211, 4
          %s221 = int_to_ptr.vmem [resolvable:$true] %s220
          %226 = dma.hbm_to_vmem [thread:$0]  %s219, 512, %s221, %s208, 64, 64, 4
        $region28: #{tpu_custom_call.1} parent=23 // pred_fallthru
          _
        // Predicated region
        $region29: #{tpu_custom_call.1} parent=23 // pred_check
          %p227 = pneg %p77
        $region30: #{tpu_custom_call.1} parent=23 // pred_check_branch
          %229 = sbr.rel (%p227) target = $region32
        $region31: #{tpu_custom_call.1} parent=23 // pred_region
          %p230 = scmp.lt.s32.totalorder %s24, 1
          %s231 = scalar_select %p230, %s24, 1
          %s232 = smul.addr %s231, 8
          %s233 = smul.addr %s232, 4
          %s234 = scalar_lea.vmem %s1, %s233
        $region32: #{tpu_custom_call.1} parent=23 // pred_fallthru
          _
        // Predicated region
        $region33: #{tpu_custom_call.1} parent=23 // pred_check
          %p235 = pneg %p103
        $region34: #{tpu_custom_call.1} parent=23 // pred_check_branch
          %237 = sbr.rel (%p235) target = $region36
        $region35: #{tpu_custom_call.1} parent=23 // pred_region
          %p238 = scmp.lt.s32.totalorder %s24, 1
          %s239 = scalar_select %p238, %s24, 1
          %s240 = smul.addr %s239, 16
          %s241 = smul.addr %s240, 4
          %s242 = scalar_lea.vmem %s2, %s241
        $region36: #{tpu_custom_call.1} parent=23 // pred_fallthru
          _
      $region24: #{tpu_custom_call.1} parent=5 // pred_fallthru
        _
      %p243 = scmp.le.s32.totalorder 1, %s17
      %p244 = scmp.lt.s32.totalorder %s17, 9
      %p245 = pnand %p243, %p244
      %p246 = pneg %p245
      // Predicated region
      $region37: #{tpu_custom_call.1} parent=5 // pred_check
        _
      $region38: #{tpu_custom_call.1} parent=5 // pred_check_branch
        %248 = sbr.rel (%p245) target = $region40
      $region39: #{tpu_custom_call.1} parent=5 // pred_region
        %s249 = ssub.s32 %s17, 1
        %s250 = sand.u32 %s44, 1
        %s251 = scalar_lea.sflag [#allocation3], %s250
        %s252 = sand.u32 %s44, 1
        %s253 = smul.addr %s252, 32
        %s254 = scalar_lea.vmem [#allocation2], %s253
        // Predicated region
        $region41: #{tpu_custom_call.1} parent=39 // pred_check
          %p255 = pneg %p57
        $region42: #{tpu_custom_call.1} parent=39 // pred_check_branch
          %257 = sbr.rel (%p255) target = $region44
        $region43: #{tpu_custom_call.1} parent=39 // pred_region
          %258 = dma.done %s251, 512
        $region44: #{tpu_custom_call.1} parent=39 // pred_fallthru
          _
        %s259 = sand.u32 %s44, 1
        %s260 = scalar_lea.sflag [#allocation3], %s259
        %s261 = sand.u32 %s44, 1
        %s262 = smul.addr %s261, 32
        %s263 = scalar_lea.vmem [#allocation2], %s262
        %p264 = pneg %p57
        %p265 = pneg %p54
        %p266 = scmp.lt.s32.totalorder %s26, 1
        %s267 = scalar_select %p266, %s26, 1
        %s268 = smul.addr %s267, 8
        %s269 = smul.addr %s268, 4
        %s270 = scalar_lea.vmem %s1, %s269
        %p271 = pneg %p83
        %p272 = pneg %p80
        %p273 = scmp.lt.s32.totalorder %s26, 1
        %s274 = scalar_select %p273, %s26, 1
        %s275 = smul.addr %s274, 16
        %s276 = smul.addr %s275, 4
        %s277 = scalar_lea.vmem %s2, %s276
        %p278 = pneg %p109
        %p279 = pneg %p106
        %p280 = pneg %p130
        %p281 = pneg %p127
        %p282 = pneg %p151
        %p283 = pneg %p148
        %p284 = pneg %p179
        %p285 = pneg %p176
        %s286 = sand.u32 %s166, 1
        %s287 = scalar_lea.sflag [#allocation4], %s286
        %s288 = sand.u32 %s166, 1
        %s289 = smul.addr %s288, 64
        %s290 = scalar_lea.vmem [#allocation5], %s289
        %s291 = smul.u32 8, %s27
        %p292 = scmp.lt.s32.totalorder %s26, 1
        %s293 = scalar_select %p292, %s26, 1
        %s294 = smul.addr %s293, 8
        %s295 = smul.addr %s294, 4
        %s296 = scalar_lea.vmem %s1, %s295
        %p297 = scmp.lt.s32.totalorder %s26, 1
        %s298 = scalar_select %p297, %s26, 1
        %s299 = smul.addr %s298, 16
        %s300 = smul.addr %s299, 4
        %s301 = scalar_lea.vmem %s2, %s300
        %s302 = smul.u32 8, %s27
        %v304 = vld [vmem:[%s254] sm:$0xf]
        %v305 = vld [vmem:[%s254 + $0x4] sm:$0xf]
        %v306 = vld [vmem:[%s254 + $0x8] sm:$0xf]
        %v307 = vld [vmem:[%s254 + $0xc] sm:$0xf]
        %v308 = vld [vmem:[%s254 + $0x10] sm:$0xf]
        %v309 = vld [vmem:[%s254 + $0x14] sm:$0xf]
        %v310 = vld [vmem:[%s254 + $0x18] sm:$0xf]
        %v311 = vld [vmem:[%s254 + $0x1c] sm:$0xf]
        %v312 = vld [vmem:[%s296] sm:$0xf]
        %v313 = vld [vmem:[%s296 + $0x4] sm:$0xf]
        %v314 = vld [vmem:[%s296 + $0x8] sm:$0xf]
        %v315 = vld [vmem:[%s296 + $0xc] sm:$0xf]
        %v316 = vld [vmem:[%s296 + $0x10] sm:$0xf]
        %v317 = vld [vmem:[%s296 + $0x14] sm:$0xf]
        %v318 = vld [vmem:[%s296 + $0x18] sm:$0xf]
        %v319 = vld [vmem:[%s296 + $0x1c] sm:$0xf]
        %v320 = vld [vmem:[%s301] sm:$0xf]
        %v321 = vld [vmem:[%s301 + $0x4] sm:$0xf]
        %v322 = vld [vmem:[%s301 + $0x8] sm:$0xf]
        %v323 = vld [vmem:[%s301 + $0xc] sm:$0xf]
        %v324 = vld [vmem:[%s301 + $0x10] sm:$0xf]
        %v325 = vld [vmem:[%s301 + $0x14] sm:$0xf]
        %v326 = vld [vmem:[%s301 + $0x18] sm:$0xf]
        %v327 = vld [vmem:[%s301 + $0x1c] sm:$0xf]
        %v328 = vld [vmem:[%s301 + $0x20] sm:$0xf]
        %v329 = vld [vmem:[%s301 + $0x24] sm:$0xf]
        %v330 = vld [vmem:[%s301 + $0x28] sm:$0xf]
        %v331 = vld [vmem:[%s301 + $0x2c] sm:$0xf]
        %v332 = vld [vmem:[%s301 + $0x30] sm:$0xf]
        %v333 = vld [vmem:[%s301 + $0x34] sm:$0xf]
        %v334 = vld [vmem:[%s301 + $0x38] sm:$0xf]
        %v335 = vld [vmem:[%s301 + $0x3c] sm:$0xf]
        %v336 = vld [vmem:[%s3] sm:$0xf]
        %v337 = vld [vmem:[%s3 + $0x4] sm:$0xf]
        %v338 = vld [vmem:[%s3 + $0x8] sm:$0xf]
        %v339 = vld [vmem:[%s3 + $0xc] sm:$0xf]
        %v340 = vld [vmem:[%s3 + $0x10] sm:$0xf]
        %v341 = vld [vmem:[%s3 + $0x14] sm:$0xf]
        %v342 = vld [vmem:[%s3 + $0x18] sm:$0xf]
        %v343 = vld [vmem:[%s3 + $0x1c] sm:$0xf]
        %v344 = vld [vmem:[%s3 + $0x20] sm:$0xf]
        %v345 = vld [vmem:[%s3 + $0x24] sm:$0xf]
        %v346 = vld [vmem:[%s3 + $0x28] sm:$0xf]
        %v347 = vld [vmem:[%s3 + $0x2c] sm:$0xf]
        %v348 = vld [vmem:[%s3 + $0x30] sm:$0xf]
        %v349 = vld [vmem:[%s3 + $0x34] sm:$0xf]
        %v350 = vld [vmem:[%s3 + $0x38] sm:$0xf]
        %v351 = vld [vmem:[%s3 + $0x3c] sm:$0xf]
        %v352 = vld [vmem:[%s4] sm:$0x1]
        %v354 = vlaneseq
        %v355 = vshrl.u32 %v354, 7
        %v356 = vsub.s32 0, %v355
        %v357 = vrot.slane %v352, %v356
        %v367 = vunpack.c.l.b16 %v304
        %v368 = vunpack.c.l.b16 %v305
        %v369 = vunpack.c.l.b16 %v306
        %v370 = vunpack.c.l.b16 %v307
        %v371 = vunpack.c.l.b16 %v308
        %v372 = vunpack.c.l.b16 %v309
        %v373 = vunpack.c.l.b16 %v310
        %v374 = vunpack.c.l.b16 %v311
        %v375 = vpack.c.b16 %v368, %v367
        %v376 = vpack.c.b16 %v370, %v369
        %v377 = vpack.c.b16 %v372, %v371
        %v378 = vpack.c.b16 %v374, %v373
        %v399 = vunpack.c.l.b16 %v336
        %v400 = vunpack.c.l.b16 %v337
        %v401 = vunpack.c.l.b16 %v338
        %v402 = vunpack.c.l.b16 %v339
        %v403 = vunpack.c.l.b16 %v340
        %v404 = vunpack.c.l.b16 %v341
        %v405 = vunpack.c.l.b16 %v342
        %v406 = vunpack.c.l.b16 %v343
        %v407 = vunpack.c.l.b16 %v344
        %v408 = vunpack.c.l.b16 %v345
        %v409 = vunpack.c.l.b16 %v346
        %v410 = vunpack.c.l.b16 %v347
        %v411 = vunpack.c.l.b16 %v348
        %v412 = vunpack.c.l.b16 %v349
        %v413 = vunpack.c.l.b16 %v350
        %v414 = vunpack.c.l.b16 %v351
        %v415 = vpack.c.b16 %v400, %v399
        %v416 = vpack.c.b16 %v402, %v401
        %v417 = vpack.c.b16 %v404, %v403
        %v418 = vpack.c.b16 %v406, %v405
        %v419 = vpack.c.b16 %v408, %v407
        %v420 = vpack.c.b16 %v410, %v409
        %v421 = vpack.c.b16 %v412, %v411
        %v422 = vpack.c.b16 %v414, %v413
        %431 = vmatprep.subr.bf16.mxu0 0
        %432 = vmatpush1.bf16.msra.mxu0 %v415
        %433 = vmatprep.subr.bf16.mxu0 0
        %434 = vmatpush1.bf16.msra.mxu0 %v416
        %435 = vmatprep.subr.bf16.mxu0 0
        %436 = vmatpush1.bf16.msra.mxu0 %v417
        %437 = vmatprep.subr.bf16.mxu0 0
        %438 = vmatpush1.bf16.msra.mxu0 %v418
        %439 = vmatprep.subr.bf16.mxu0 0
        %440 = vmatpush1.bf16.msra.mxu0 %v419
        %441 = vmatprep.subr.bf16.mxu0 0
        %442 = vmatpush1.bf16.msra.mxu0 %v420
        %443 = vmatprep.subr.bf16.mxu0 0
        %444 = vmatpush1.bf16.msra.mxu0 %v421
        %445 = vmatprep.subr.bf16.mxu0 0
        %446 = vmatpush1.bf16.msra.mxu0 %v422
        %447 = vmatprep.subr.bf16.mxu0 0
        %448 = vmatpush1.bf16.msra.mxu0 0
        %449 = vmatprep.subr.bf16.mxu0 0
        %450 = vmatpush1.bf16.msra.mxu0 0
        %451 = vmatprep.subr.bf16.mxu0 0
        %452 = vmatpush1.bf16.msra.mxu0 0
        %453 = vmatprep.subr.bf16.mxu0 0
        %454 = vmatpush1.bf16.msra.mxu0 0
        %455 = vmatprep.subr.bf16.mxu0 0
        %456 = vmatpush1.bf16.msra.mxu0 0
        %457 = vmatprep.subr.bf16.mxu0 0
        %458 = vmatpush1.bf16.msra.mxu0 0
        %459 = vmatprep.subr.bf16.mxu0 0
        %460 = vmatpush1.bf16.msra.mxu0 0
        %461 = vmatprep.subr.bf16.mxu0 0
        %462 = vmatpush1.bf16.msra.mxu0 0
        %463 = vmatprep.mubr.bf16.mxu0 0
        %464 = vmatmul.mubr.bf16.gmra.mrb[0].mxu0 %v375
        %v465 = vpop.f32.mrb[0].mxu0
        %v466 = vadd.f32 %v357, %v465
        %v467 = vpop.f32.mrb[0].mxu0
        %v468 = vpop.f32.mrb[0].mxu0
        %v469 = vadd.f32 %v357, %v468
        %v470 = vpop.f32.mrb[0].mxu0
        %471 = vmatprep.mubr.bf16.mxu0 0
        %472 = vmatmul.mubr.bf16.gmra.mrb[0].mxu0 %v376
        %v473 = vpop.f32.mrb[0].mxu0
        %v474 = vadd.f32 %v357, %v473
        %v475 = vpop.f32.mrb[0].mxu0
        %v476 = vpop.f32.mrb[0].mxu0
        %v477 = vadd.f32 %v357, %v476
        %v478 = vpop.f32.mrb[0].mxu0
        %479 = vmatprep.mubr.bf16.mxu0 0
        %480 = vmatmul.mubr.bf16.gmra.mrb[0].mxu0 %v377
        %v481 = vpop.f32.mrb[0].mxu0
        %v482 = vadd.f32 %v357, %v481
        %v483 = vpop.f32.mrb[0].mxu0
        %v484 = vpop.f32.mrb[0].mxu0
        %v485 = vadd.f32 %v357, %v484
        %v486 = vpop.f32.mrb[0].mxu0
        %487 = vmatprep.mubr.bf16.mxu0 0
        %488 = vmatmul.mubr.bf16.gmra.mrb[0].mxu0 %v378
        %v489 = vpop.f32.mrb[0].mxu0
        %v490 = vadd.f32 %v357, %v489
        %v491 = vpop.f32.mrb[0].mxu0
        %v492 = vpop.f32.mrb[0].mxu0
        %v493 = vadd.f32 %v357, %v492
        %v494 = vpop.f32.mrb[0].mxu0
        %495 = vdwg.mxu0
        %v496 = vpack.c.bf16 %v469, %v466
        %v497 = vpack.c.bf16 %v477, %v474
        %v498 = vpack.c.bf16 %v485, %v482
        %v499 = vpack.c.bf16 %v493, %v490
        %v516 = vunpack.c.l.b16 %v320
        %v517 = vunpack.c.l.b16 %v321
        %v518 = vunpack.c.l.b16 %v322
        %v519 = vunpack.c.l.b16 %v323
        %v520 = vunpack.c.l.b16 %v324
        %v521 = vunpack.c.l.b16 %v325
        %v522 = vunpack.c.l.b16 %v326
        %v523 = vunpack.c.l.b16 %v327
        %v524 = vunpack.c.l.b16 %v328
        %v525 = vunpack.c.l.b16 %v329
        %v526 = vunpack.c.l.b16 %v330
        %v527 = vunpack.c.l.b16 %v331
        %v528 = vunpack.c.l.b16 %v332
        %v529 = vunpack.c.l.b16 %v333
        %v530 = vunpack.c.l.b16 %v334
        %v531 = vunpack.c.l.b16 %v335
        %v532 = vpack.c.b16 %v517, %v516
        %v533 = vpack.c.b16 %v519, %v518
        %v534 = vpack.c.b16 %v521, %v520
        %v535 = vpack.c.b16 %v523, %v522
        %v536 = vpack.c.b16 %v525, %v524
        %v537 = vpack.c.b16 %v527, %v526
        %v538 = vpack.c.b16 %v529, %v528
        %v539 = vpack.c.b16 %v531, %v530
        %548 = vmatprep.subr.bf16.mxu0 0
        %549 = vmatpush1.bf16.msra.mxu0 %v532
        %550 = vmatprep.subr.bf16.mxu0 0
        %551 = vmatpush1.bf16.msra.mxu0 %v533
        %552 = vmatprep.subr.bf16.mxu0 0
        %553 = vmatpush1.bf16.msra.mxu0 %v534
        %554 = vmatprep.subr.bf16.mxu0 0
        %555 = vmatpush1.bf16.msra.mxu0 %v535
        %556 = vmatprep.subr.bf16.mxu0 0
        %557 = vmatpush1.bf16.msra.mxu0 %v536
        %558 = vmatprep.subr.bf16.mxu0 0
        %559 = vmatpush1.bf16.msra.mxu0 %v537
        %560 = vmatprep.subr.bf16.mxu0 0
        %561 = vmatpush1.bf16.msra.mxu0 %v538
        %562 = vmatprep.subr.bf16.mxu0 0
        %563 = vmatpush1.bf16.msra.mxu0 %v539
        %564 = vmatprep.subr.bf16.mxu0 0
        %565 = vmatpush1.bf16.msra.mxu0 0
        %566 = vmatprep.subr.bf16.mxu0 0
        %567 = vmatpush1.bf16.msra.mxu0 0
        %568 = vmatprep.subr.bf16.mxu0 0
        %569 = vmatpush1.bf16.msra.mxu0 0
        %570 = vmatprep.subr.bf16.mxu0 0
        %571 = vmatpush1.bf16.msra.mxu0 0
        %572 = vmatprep.subr.bf16.mxu0 0
        %573 = vmatpush1.bf16.msra.mxu0 0
        %574 = vmatprep.subr.bf16.mxu0 0
        %575 = vmatpush1.bf16.msra.mxu0 0
        %576 = vmatprep.subr.bf16.mxu0 0
        %577 = vmatpush1.bf16.msra.mxu0 0
        %578 = vmatprep.subr.bf16.mxu0 0
        %579 = vmatpush1.bf16.msra.mxu0 0
        %580 = vmatprep.mubr.bf16.mxu0 0
        %581 = vmatmul.mubr.bf16.gmra.mrb[0].mxu0 %v496
        %v582 = vpop.f32.mrb[0].mxu0
        %v583 = vadd.f32 0.0, %v582
        %v584 = vpop.f32.mrb[0].mxu0
        %v585 = vpop.f32.mrb[0].mxu0
        %v586 = vadd.f32 0.0, %v585
        %v587 = vpop.f32.mrb[0].mxu0
        %588 = vmatprep.mubr.bf16.mxu0 0
        %589 = vmatmul.mubr.bf16.gmra.mrb[0].mxu0 %v497
        %v590 = vpop.f32.mrb[0].mxu0
        %v591 = vadd.f32 0.0, %v590
        %v592 = vpop.f32.mrb[0].mxu0
        %v593 = vpop.f32.mrb[0].mxu0
        %v594 = vadd.f32 0.0, %v593
        %v595 = vpop.f32.mrb[0].mxu0
        %596 = vmatprep.mubr.bf16.mxu0 0
        %597 = vmatmul.mubr.bf16.gmra.mrb[0].mxu0 %v498
        %v598 = vpop.f32.mrb[0].mxu0
        %v599 = vadd.f32 0.0, %v598
        %v600 = vpop.f32.mrb[0].mxu0
        %v601 = vpop.f32.mrb[0].mxu0
        %v602 = vadd.f32 0.0, %v601
        %v603 = vpop.f32.mrb[0].mxu0
        %604 = vmatprep.mubr.bf16.mxu0 0
        %605 = vmatmul.mubr.bf16.gmra.mrb[0].mxu0 %v499
        %v606 = vpop.f32.mrb[0].mxu0
        %v607 = vadd.f32 0.0, %v606
        %v608 = vpop.f32.mrb[0].mxu0
        %v609 = vpop.f32.mrb[0].mxu0
        %v610 = vadd.f32 0.0, %v609
        %v611 = vpop.f32.mrb[0].mxu0
        %612 = vdwg.mxu0
        %vm613 = vcmask 523264
        %v614 = vsel %vm613, %v583, -inf
        %615 = vmax.xlane.f32.xlu0 %v614
        %v616 = vpop.xlane.xlu0 %615
        %v617 = vsel %vm613, %v586, -inf
        %618 = vmax.xlane.f32.xlu0 %v617
        %v619 = vpop.xlane.xlu0 %618
        %v620 = vsel %vm613, %v591, -inf
        %621 = vmax.xlane.f32.xlu0 %v620
        %v622 = vpop.xlane.xlu0 %621
        %v623 = vsel %vm613, %v594, -inf
        %624 = vmax.xlane.f32.xlu0 %v623
        %v625 = vpop.xlane.xlu0 %624
        %v626 = vsel %vm613, %v599, -inf
        %627 = vmax.xlane.f32.xlu0 %v626
        %v628 = vpop.xlane.xlu0 %627
        %v629 = vsel %vm613, %v602, -inf
        %630 = vmax.xlane.f32.xlu0 %v629
        %v631 = vpop.xlane.xlu0 %630
        %v632 = vsel %vm613, %v607, -inf
        %633 = vmax.xlane.f32.xlu0 %v632
        %v634 = vpop.xlane.xlu0 %633
        %v635 = vsel %vm613, %v610, -inf
        %636 = vmax.xlane.f32.xlu0 %v635
        %v637 = vpop.xlane.xlu0 %636
        %v638 = vsub.f32 %v583, %v616
        %v639 = vsub.f32 %v586, %v619
        %v640 = vsub.f32 %v591, %v622
        %v641 = vsub.f32 %v594, %v625
        %v642 = vsub.f32 %v599, %v628
        %v643 = vsub.f32 %v602, %v631
        %v644 = vsub.f32 %v607, %v634
        %v645 = vsub.f32 %v610, %v637
        %v646 = vmul.f32 %v638, 1.442695
        %v647 = vpow.pop %v646
        %v648 = vmul.f32 %v639, 1.442695
        %v649 = vpow.pop %v648
        %v650 = vmul.f32 %v640, 1.442695
        %v651 = vpow.pop %v650
        %v652 = vmul.f32 %v641, 1.442695
        %v653 = vpow.pop %v652
        %v654 = vmul.f32 %v642, 1.442695
        %v655 = vpow.pop %v654
        %v656 = vmul.f32 %v643, 1.442695
        %v657 = vpow.pop %v656
        %v658 = vmul.f32 %v644, 1.442695
        %v659 = vpow.pop %v658
        %v660 = vmul.f32 %v645, 1.442695
        %v661 = vpow.pop %v660
        %v662 = vsel %vm613, %v647, 0.0
        %663 = vadd.xlane.f32.xlu0 %v662
        %v664 = vpop.xlane.xlu0 %663
        %v665 = vsel %vm613, %v649, 0.0
        %666 = vadd.xlane.f32.xlu0 %v665
        %v667 = vpop.xlane.xlu0 %666
        %v668 = vsel %vm613, %v651, 0.0
        %669 = vadd.xlane.f32.xlu0 %v668
        %v670 = vpop.xlane.xlu0 %669
        %v671 = vsel %vm613, %v653, 0.0
        %672 = vadd.xlane.f32.xlu0 %v671
        %v673 = vpop.xlane.xlu0 %672
        %v674 = vsel %vm613, %v655, 0.0
        %675 = vadd.xlane.f32.xlu0 %v674
        %v676 = vpop.xlane.xlu0 %675
        %v677 = vsel %vm613, %v657, 0.0
        %678 = vadd.xlane.f32.xlu0 %v677
        %v679 = vpop.xlane.xlu0 %678
        %v680 = vsel %vm613, %v659, 0.0
        %681 = vadd.xlane.f32.xlu0 %v680
        %v682 = vpop.xlane.xlu0 %681
        %v683 = vsel %vm613, %v661, 0.0
        %684 = vadd.xlane.f32.xlu0 %v683
        %v685 = vpop.xlane.xlu0 %684
        %v686 = vrcp.pop %v664
        %v687 = vrcp.pop %v667
        %v688 = vrcp.pop %v670
        %v689 = vrcp.pop %v673
        %v690 = vrcp.pop %v676
        %v691 = vrcp.pop %v679
        %v692 = vrcp.pop %v682
        %v693 = vrcp.pop %v685
        %v694 = vmul.f32 %v664, %v686
        %v695 = vmul.f32 %v667, %v687
        %v696 = vmul.f32 %v670, %v688
        %v697 = vmul.f32 %v673, %v689
        %v698 = vmul.f32 %v676, %v690
        %v699 = vmul.f32 %v679, %v691
        %v700 = vmul.f32 %v682, %v692
        %v701 = vmul.f32 %v685, %v693
        %v702 = vsub.f32 2.0, %v694
        %v703 = vsub.f32 2.0, %v695
        %v704 = vsub.f32 2.0, %v696
        %v705 = vsub.f32 2.0, %v697
        %v706 = vsub.f32 2.0, %v698
        %v707 = vsub.f32 2.0, %v699
        %v708 = vsub.f32 2.0, %v700
        %v709 = vsub.f32 2.0, %v701
        %v710 = vmul.f32 %v686, %v702
        %v711 = vmul.f32 %v687, %v703
        %v712 = vmul.f32 %v688, %v704
        %v713 = vmul.f32 %v689, %v705
        %v714 = vmul.f32 %v690, %v706
        %v715 = vmul.f32 %v691, %v707
        %v716 = vmul.f32 %v692, %v708
        %v717 = vmul.f32 %v693, %v709
        %v718 = vpack.c.bf16 %v649, %v647
        %v719 = vpack.c.bf16 %v653, %v651
        %v720 = vpack.c.bf16 %v657, %v655
        %v721 = vpack.c.bf16 %v661, %v659
        %v730 = vunpack.c.l.b16 %v312
        %v731 = vunpack.c.l.b16 %v313
        %v732 = vunpack.c.l.b16 %v314
        %v733 = vunpack.c.l.b16 %v315
        %v734 = vunpack.c.l.b16 %v316
        %v735 = vunpack.c.l.b16 %v317
        %v736 = vunpack.c.l.b16 %v318
        %v737 = vunpack.c.l.b16 %v319
        %v738 = vpack.c.b16 %v731, %v730
        %v739 = vpack.c.b16 %v733, %v732
        %v740 = vpack.c.b16 %v735, %v734
        %v741 = vpack.c.b16 %v737, %v736
        %v747 = vsel %vm613, %v718, 0
        %v750 = vsel %vm613, %v719, 0
        %v753 = vsel %vm613, %v720, 0
        %v756 = vsel %vm613, %v721, 0
        %758 = vmatprep.subr.bf16.mxu0 0
        %759 = vmatpush1.bf16.msra.mxu0 %v738
        %760 = vmatprep.subr.bf16.mxu0 0
        %761 = vmatpush1.bf16.msra.mxu0 %v739
        %762 = vmatprep.subr.bf16.mxu0 0
        %763 = vmatpush1.bf16.msra.mxu0 %v740
        %764 = vmatprep.subr.bf16.mxu0 0
        %765 = vmatpush1.bf16.msra.mxu0 %v741
        %766 = vmatprep.subr.bf16.mxu0 0
        %767 = vmatpush1.bf16.msra.mxu0 0
        %768 = vmatprep.subr.bf16.mxu0 0
        %769 = vmatpush1.bf16.msra.mxu0 0
        %770 = vmatprep.subr.bf16.mxu0 0
        %771 = vmatpush1.bf16.msra.mxu0 0
        %772 = vmatprep.subr.bf16.mxu0 0
        %773 = vmatpush1.bf16.msra.mxu0 0
        %774 = vmatprep.subr.bf16.mxu0 0
        %775 = vmatpush1.bf16.msra.mxu0 0
        %776 = vmatprep.subr.bf16.mxu0 0
        %777 = vmatpush1.bf16.msra.mxu0 0
        %778 = vmatprep.subr.bf16.mxu0 0
        %779 = vmatpush1.bf16.msra.mxu0 0
        %780 = vmatprep.subr.bf16.mxu0 0
        %781 = vmatpush1.bf16.msra.mxu0 0
        %782 = vmatprep.subr.bf16.mxu0 0
        %783 = vmatpush1.bf16.msra.mxu0 0
        %784 = vmatprep.subr.bf16.mxu0 0
        %785 = vmatpush1.bf16.msra.mxu0 0
        %786 = vmatprep.subr.bf16.mxu0 0
        %787 = vmatpush1.bf16.msra.mxu0 0
        %788 = vmatprep.subr.bf16.mxu0 0
        %789 = vmatpush1.bf16.msra.mxu0 0
        %790 = vmatprep.mubr.bf16.mxu0 0
        %791 = vmatmul.mubr.bf16.gmra.mrb[0].mxu0 %v747
        %v792 = vpop.f32.mrb[0].mxu0
        %v793 = vadd.f32 0.0, %v792
        %v794 = vpop.f32.mrb[0].mxu0
        %v795 = vpop.f32.mrb[0].mxu0
        %v796 = vadd.f32 0.0, %v795
        %v797 = vpop.f32.mrb[0].mxu0
        %798 = vmatprep.mubr.bf16.mxu0 0
        %799 = vmatmul.mubr.bf16.gmra.mrb[0].mxu0 %v750
        %v800 = vpop.f32.mrb[0].mxu0
        %v801 = vadd.f32 0.0, %v800
        %v802 = vpop.f32.mrb[0].mxu0
        %v803 = vpop.f32.mrb[0].mxu0
        %v804 = vadd.f32 0.0, %v803
        %v805 = vpop.f32.mrb[0].mxu0
        %806 = vmatprep.mubr.bf16.mxu0 0
        %807 = vmatmul.mubr.bf16.gmra.mrb[0].mxu0 %v753
        %v808 = vpop.f32.mrb[0].mxu0
        %v809 = vadd.f32 0.0, %v808
        %v810 = vpop.f32.mrb[0].mxu0
        %v811 = vpop.f32.mrb[0].mxu0
        %v812 = vadd.f32 0.0, %v811
        %v813 = vpop.f32.mrb[0].mxu0
        %814 = vmatprep.mubr.bf16.mxu0 0
        %815 = vmatmul.mubr.bf16.gmra.mrb[0].mxu0 %v756
        %v816 = vpop.f32.mrb[0].mxu0
        %v817 = vadd.f32 0.0, %v816
        %v818 = vpop.f32.mrb[0].mxu0
        %v819 = vpop.f32.mrb[0].mxu0
        %v820 = vadd.f32 0.0, %v819
        %v821 = vpop.f32.mrb[0].mxu0
        %822 = vdwg.mxu0
        %v823 = vmul.f32 %v793, %v710
        %v824 = vmul.f32 %v796, %v711
        %v825 = vmul.f32 %v801, %v712
        %v826 = vmul.f32 %v804, %v713
        %v827 = vmul.f32 %v809, %v714
        %v828 = vmul.f32 %v812, %v715
        %v829 = vmul.f32 %v817, %v716
        %v830 = vmul.f32 %v820, %v717
        %v831 = vxor.u32 %v466, 2147483648
        %v832 = vxor.u32 %v469, 2147483648
        %v833 = vxor.u32 %v474, 2147483648
        %v834 = vxor.u32 %v477, 2147483648
        %v835 = vxor.u32 %v482, 2147483648
        %v836 = vxor.u32 %v485, 2147483648
        %v837 = vxor.u32 %v490, 2147483648
        %v838 = vxor.u32 %v493, 2147483648
        %v839 = vmul.f32 %v831, 1.442695
        %v840 = vpow.pop %v839
        %v841 = vmul.f32 %v832, 1.442695
        %v842 = vpow.pop %v841
        %v843 = vmul.f32 %v833, 1.442695
        %v844 = vpow.pop %v843
        %v845 = vmul.f32 %v834, 1.442695
        %v846 = vpow.pop %v845
        %v847 = vmul.f32 %v835, 1.442695
        %v848 = vpow.pop %v847
        %v849 = vmul.f32 %v836, 1.442695
        %v850 = vpow.pop %v849
        %v851 = vmul.f32 %v837, 1.442695
        %v852 = vpow.pop %v851
        %v853 = vmul.f32 %v838, 1.442695
        %v854 = vpow.pop %v853
        %v855 = vadd.f32 %v840, 1.0
        %v856 = vadd.f32 %v842, 1.0
        %v857 = vadd.f32 %v844, 1.0
        %v858 = vadd.f32 %v846, 1.0
        %v859 = vadd.f32 %v848, 1.0
        %v860 = vadd.f32 %v850, 1.0
        %v861 = vadd.f32 %v852, 1.0
        %v862 = vadd.f32 %v854, 1.0
        %v863 = vrcp.pop %v855
        %v864 = vmul.f32 1.0, %v863
        %v865 = vrcp.pop %v856
        %v866 = vmul.f32 1.0, %v865
        %v867 = vrcp.pop %v857
        %v868 = vmul.f32 1.0, %v867
        %v869 = vrcp.pop %v858
        %v870 = vmul.f32 1.0, %v869
        %v871 = vrcp.pop %v859
        %v872 = vmul.f32 1.0, %v871
        %v873 = vrcp.pop %v860
        %v874 = vmul.f32 1.0, %v873
        %v875 = vrcp.pop %v861
        %v876 = vmul.f32 1.0, %v875
        %v877 = vrcp.pop %v862
        %v878 = vmul.f32 1.0, %v877
        %v879 = vunpack.c.l.bf16 %v304
        %v880 = vunpack.c.l.bf16 %v305
        %v881 = vunpack.c.l.bf16 %v306
        %v882 = vunpack.c.l.bf16 %v307
        %v883 = vunpack.c.l.bf16 %v308
        %v884 = vunpack.c.l.bf16 %v309
        %v885 = vunpack.c.l.bf16 %v310
        %v886 = vunpack.c.l.bf16 %v311
        %v887 = vsub.f32 %v879, %v823
        %v888 = vsub.f32 %v880, %v824
        %v889 = vsub.f32 %v881, %v825
        %v890 = vsub.f32 %v882, %v826
        %v891 = vsub.f32 %v883, %v827
        %v892 = vsub.f32 %v884, %v828
        %v893 = vsub.f32 %v885, %v829
        %v894 = vsub.f32 %v886, %v830
        %896 = vset.pattern.permute.xlu0 0
        %897 = vperm.xlu0 %896, %v864
        %v898 = vpop.permute.xlu0 %897
        %901 = vset.pattern.permute.xlu0 0
        %902 = vperm.xlu0 %901, %v866
        %v903 = vpop.permute.xlu0 %902
        %906 = vset.pattern.permute.xlu0 0
        %907 = vperm.xlu0 %906, %v868
        %v908 = vpop.permute.xlu0 %907
        %911 = vset.pattern.permute.xlu0 0
        %912 = vperm.xlu0 %911, %v870
        %v913 = vpop.permute.xlu0 %912
        %916 = vset.pattern.permute.xlu0 0
        %917 = vperm.xlu0 %916, %v872
        %v918 = vpop.permute.xlu0 %917
        %921 = vset.pattern.permute.xlu0 0
        %922 = vperm.xlu0 %921, %v874
        %v923 = vpop.permute.xlu0 %922
        %926 = vset.pattern.permute.xlu0 0
        %927 = vperm.xlu0 %926, %v876
        %v928 = vpop.permute.xlu0 %927
        %931 = vset.pattern.permute.xlu0 0
        %932 = vperm.xlu0 %931, %v878
        %v933 = vpop.permute.xlu0 %932
        %v935 = vmul.f32 %v898, %v887
        %v936 = vmul.f32 %v903, %v888
        %v937 = vmul.f32 %v908, %v889
        %v938 = vmul.f32 %v913, %v890
        %v939 = vmul.f32 %v918, %v891
        %v940 = vmul.f32 %v923, %v892
        %v941 = vmul.f32 %v928, %v893
        %v942 = vmul.f32 %v933, %v894
        %v943 = vadd.f32 %v823, %v935
        %v944 = vadd.f32 %v824, %v936
        %v945 = vadd.f32 %v825, %v937
        %v946 = vadd.f32 %v826, %v938
        %v947 = vadd.f32 %v827, %v939
        %v948 = vadd.f32 %v828, %v940
        %v949 = vadd.f32 %v829, %v941
        %v950 = vadd.f32 %v830, %v942
        %951 = vst [vmem:[%s290] sm:$0xff] %v943
        %952 = vst [vmem:[%s290 + $0x8] sm:$0xff] %v944
        %953 = vst [vmem:[%s290 + $0x10] sm:$0xff] %v945
        %954 = vst [vmem:[%s290 + $0x18] sm:$0xff] %v946
        %955 = vst [vmem:[%s290 + $0x20] sm:$0xff] %v947
        %956 = vst [vmem:[%s290 + $0x28] sm:$0xff] %v948
        %957 = vst [vmem:[%s290 + $0x30] sm:$0xff] %v949
        %958 = vst [vmem:[%s290 + $0x38] sm:$0xff] %v950
        %s959 = sand.u32 %s166, 1
        %s960 = scalar_lea.sflag [#allocation4], %s959
        %s961 = sand.u32 %s166, 1
        %s962 = smul.addr %s961, 64
        %s963 = scalar_lea.vmem [#allocation5], %s962
        // Predicated region
        $region45: #{tpu_custom_call.1} parent=39 // pred_check
          %p964 = pneg %p176
        $region46: #{tpu_custom_call.1} parent=39 // pred_check_branch
          %966 = sbr.rel (%p964) target = $region48
        $region47: #{tpu_custom_call.1} parent=39 // pred_region
          %s967 = smul.u32 8, %s27
          %s969 = ssub.s32 1024, 1024
          %970 = vsyncadd %s960, %s969
          %s971 = smul.addr %s26, 32
          %s972 = sadd.s32 %s967, %s971
          %s973 = smul.addr %s972, 128
          %s974 = scalar_lea.hbm %s5, %s973
          %s975 = sshll.u32 %s963, 4
          %s976 = int_to_ptr.vmem [resolvable:$true] %s975
          %981 = dma.vmem_to_hbm [thread:$0]  %s976, 1024, %s974, %s960, 128, 128, 8
        $region48: #{tpu_custom_call.1} parent=39 // pred_fallthru
          _
      $region40: #{tpu_custom_call.1} parent=5 // pred_fallthru
        _
      %p982 = scmp.le.s32.totalorder 2, %s17
      // Predicated region
      $region49: #{tpu_custom_call.1} parent=5 // pred_check
        %p983 = pneg %p982
      $region50: #{tpu_custom_call.1} parent=5 // pred_check_branch
        %985 = sbr.rel (%p983) target = $region52
      $region51: #{tpu_custom_call.1} parent=5 // pred_region
        %s986 = ssub.s32 %s17, 2
        // Predicated region
        $region53: #{tpu_custom_call.1} parent=51 // pred_check
          %p987 = pneg %p182
        $region54: #{tpu_custom_call.1} parent=51 // pred_check_branch
          %989 = sbr.rel (%p987) target = $region56
        $region55: #{tpu_custom_call.1} parent=51 // pred_region
          %s990 = sand.u32 %s167, 1
          %s991 = scalar_lea.sflag [#allocation4], %s990
          %s992 = sand.u32 %s167, 1
          %s993 = smul.addr %s992, 64
          %s994 = scalar_lea.vmem [#allocation5], %s993
          %995 = dma.done %s991, 1024
        $region56: #{tpu_custom_call.1} parent=51 // pred_fallthru
          _
      $region52: #{tpu_custom_call.1} parent=5 // pred_fallthru
        _
    $region6: #{tpu_custom_call.1} parent=1 // loop_footer
      %s21 = sadd.s32 1, %s17
    $region7: #{tpu_custom_call.1} parent=1 // loop_footer_branch
      %16 = sbr.rel target = $region3
    $region8: #{tpu_custom_call.1} parent=1 // loop_exit
      _
    %996 = vsyncpa [#allocation3], 1
    %s997 = scalar_lea.sflag [#allocation3], 1
    %998 = vsyncpa %s997, 1
    %999 = vsyncpa [#allocation4], 1
    %s1000 = scalar_lea.sflag [#allocation4], 1
    %1001 = vsyncpa %s1000, 1

</llo_original>
